<compile_context>
chip_gen: v5e
topology: v5e:2x2
jax: 0.10.0
libtpu: 0.0.40
codegen_flags: <defaults>
</compile_context>

<pallas_src>
import jax
import jax.numpy as jnp
from jax.experimental import pallas as pl
from jax.experimental.pallas import tpu as pltpu

K = 4                       # contraction dim of every weight
LANE = 128                  # TPU lane width
ROWS_PER_PACK = LANE // K   # 32 x-rows per packed 128-lane row
R_TILE_MAX = 1024           # packed rows per grid step (= 32768 x rows)
_MIN_PALLAS_ROWS = 256      # below this, fused XLA x @ w wins (dispatch + step overhead)


def _dense_kernel(wbig_ref, x_ref, o_ref):
    """o = x_packed @ kron(I_32, w)   (lane-dense on both sides).

    wbig_ref: (128, 32*n) f32 block-diagonal weight, resident across the grid
    x_ref   : (r_tile, 128) packed x tile (32 x-rows x 4 features per row)
    o_ref   : (r_tile, 32*n) packed y tile (32 y-rows x n channels per row)
    """
    x = x_ref[...].astype(jnp.float32)          # in-register upcast only
    o_ref[...] = jnp.dot(
        x, wbig_ref[...], preferred_element_type=jnp.float32
    ).astype(o_ref.dtype)


def _pack_weight(w):
    """(4, n) -> (128, 32n) block-diagonal slab: Wbig[4q+k, nq+c] = w[k, c]."""
    k, n = w.shape
    assert k == K and 1 <= n <= K
    return jnp.kron(jnp.eye(ROWS_PER_PACK, dtype=jnp.float32), w.astype(jnp.float32))


def _choose_r_tile(m_pack):
    """Packed rows per grid step: big tiles, but keep >=2 steps when possible."""
    if m_pack <= 8:
        return m_pack                          # single full-extent block (legal)
    if m_pack >= 2 * R_TILE_MAX:
        return R_TILE_MAX
    half = (m_pack + 1) // 2                   # 2-step grid -> one tile per v7x TC
    return min(R_TILE_MAX, ((half + 7) // 8) * 8)


@jax.jit
def _dense_pallas(x, wbig):
    """Batched x @ w via the single-pass packed kernel.  x: (M, 4), M % 32 == 0."""
    m, k = x.shape
    n = wbig.shape[1] // ROWS_PER_PACK
    m_pack = m // ROWS_PER_PACK
    nw = ROWS_PER_PACK * n

    xv = x.reshape(m_pack, LANE)               # free: row-major contiguous view
    r_tile = _choose_r_tile(m_pack)
    grid = (pl.cdiv(m_pack, r_tile),)
    itemsize = jnp.dtype(x.dtype).itemsize

    out = pl.pallas_call(
        _dense_kernel,
        out_shape=jax.ShapeDtypeStruct((m_pack, nw), x.dtype),
        grid=grid,
        in_specs=[
            pl.BlockSpec((LANE, nw), lambda i: (0, 0)),       # weight resident
            pl.BlockSpec((r_tile, LANE), lambda i: (i, 0)),   # packed x tile
        ],
        out_specs=pl.BlockSpec((r_tile, nw), lambda i: (i, 0)),
        compiler_params=pltpu.CompilerParams(
            dimension_semantics=("parallel",),                # independent M tiles
        ),
        cost_estimate=pl.CostEstimate(
            flops=2 * m_pack * LANE * nw,
            transcendentals=0,
            bytes_accessed=(m_pack * LANE + LANE * nw + m_pack * nw) * itemsize,
        ),
    )(wbig, xv)

    return out.reshape(m, n)                   # free: row-major contiguous view


class MyDense:
    """JAX re-implementation of the PyTorch MyDense module."""

    def __init__(self, key):
        k1, k2, k3 = jax.random.split(key, 3)
        self.params = {
            "linear1": jax.random.normal(k1, (4, 4), dtype=jnp.float32),
            "linear2": jax.random.normal(k2, (4, 1), dtype=jnp.float32),
            "linear3": jax.random.normal(k3, (4, 2), dtype=jnp.float32),
        }
        # One (128, 32n) block-diagonal slab per choice, built once at init.
        self._packed = {name: _pack_weight(w) for name, w in self.params.items()}

    def __call__(self, x, choice="linear1"):
        w = self.params[choice]
        m = x.shape[0]
        # Size guard: tiny batches are pure dispatch overhead for a custom call;
        # let XLA fuse them.  Note: XLA path computes in x.dtype, the Pallas
        # path accumulates in f32 and casts back (may differ slightly for bf16).
        # TODO(synk): benchmark vs plain x @ w at realistic M per generation and
        # raise this guard (or drop the kernel) if XLA still wins.
        if m < _MIN_PALLAS_ROWS:
            return x @ w
        pad = (-m) % ROWS_PER_PACK
        if pad:
            x = jnp.pad(x, ((0, pad), (0, 0)))   # rare ragged-tail path only
        out = _dense_pallas(x, self._packed[choice])
        return out[:m] if pad else out


if __name__ == "__main__":
    key = jax.random.PRNGKey(0)
    model = MyDense(key)

    # 1) The module's literal input: x = torch.ones(1, 4) -> tiny-case XLA path.
    x_tiny = jnp.ones((1, 4), dtype=jnp.float32)
    for choice in ("linear1", "linear2", "linear3"):
        out = model(x_tiny, choice=choice)
        ref = x_tiny @ model.params[choice]
        assert out.shape == ref.shape, (out.shape, ref.shape)
        assert jnp.allclose(out, ref, atol=1e-5, rtol=1e-5), choice

    # 2) Batched inputs -> single-pass lane-dense Pallas kernel
    #    (1000 rows exercises the ragged-tail pad/slice path).
    for m in (1024, 1000):
        x_big = jax.random.normal(jax.random.PRNGKey(1), (m, 4), dtype=jnp.float32)
        for choice in ("linear1", "linear2", "linear3"):
            out = model(x_big, choice=choice)
            jax.block_until_ready(out)
            ref = x_big @ model.params[choice]
            assert out.shape == ref.shape, (out.shape, ref.shape)
            assert jnp.allclose(out, ref, atol=1e-4, rtol=1e-4), (choice, m)

    print("KERNEL_OK")
</pallas_src>

<mosaic_0001>
module attributes {stable_mosaic.version = 11 : i64} {
  func.func @_dense_kernel(%arg0: i32, %arg1: memref<128x128xf32, #tpu.memory_space<vmem>>, %arg2: memref<16x128xf32, #tpu.memory_space<vmem>>, %arg3: memref<16x128xf32, #tpu.memory_space<vmem>>) attributes {dimension_semantics = [#tpu.dimension_semantics<parallel>], iteration_bounds = array<i64: 2>, scalar_prefetch = 0 : i64, scratch_operands = 0 : i64, tpu.core_type = #tpu.core_type<tc>, window_params = [{pipeline_mode = #tpu.pipeline_mode<synchronous>, transform_indices = @transform_0, window_bounds = array<i64: 128, 128>}, {transform_indices = @transform_1, window_bounds = array<i64: 16, 128>}, {transform_indices = @transform_2, window_bounds = array<i64: 16, 128>}]} {
    %c0 = arith.constant 0 : index
    %c0_0 = arith.constant 0 : index
    %0 = vector.load %arg2[%c0, %c0_0] : memref<16x128xf32, #tpu.memory_space<vmem>>, vector<16x128xf32>
    %c0_1 = arith.constant 0 : index
    %c0_2 = arith.constant 0 : index
    %1 = vector.load %arg1[%c0_1, %c0_2] : memref<128x128xf32, #tpu.memory_space<vmem>>, vector<128x128xf32>
    %cst = arith.constant dense<0.000000e+00> : vector<16x128xf32>
    %2 = tpu.matmul %0, %1, %cst {dimension_numbers = #tpu.dot_dimension_numbers<[1], [0], [0], [1], [0, 0, 1, 1], [], []>} : vector<16x128xf32>, vector<128x128xf32>, vector<16x128xf32> -> vector<16x128xf32>
    %c0_3 = arith.constant 0 : index
    %c0_4 = arith.constant 0 : index
    %3 = vector.load %arg3[%c0_3, %c0_4] : memref<16x128xf32, #tpu.memory_space<vmem>>, vector<16x128xf32>
    tpu.vector_store %arg3[%c0_3, %c0_4], %2 {strides = array<i32>} : memref<16x128xf32, #tpu.memory_space<vmem>>, vector<16x128xf32>,
    return
  }
  func.func @transform_0(%arg0: i32) -> (i32, i32) {
    %c0_i32 = arith.constant 0 : i32
    %c0_i32_0 = arith.constant 0 : i32
    %c0_i32_1 = arith.constant 0 : i32
    return %c0_i32, %c0_i32_0 : i32, i32
  }
  func.func @transform_1(%arg0: i32) -> (i32, i32) {
    %c0_i32 = arith.constant 0 : i32
    %c0_i32_0 = arith.constant 0 : i32
    return %arg0, %c0_i32 : i32, i32
  }
  func.func @transform_2(%arg0: i32) -> (i32, i32) {
    %c0_i32 = arith.constant 0 : i32
    %c0_i32_0 = arith.constant 0 : i32
    return %arg0, %c0_i32 : i32, i32
  }
}

</mosaic_0001>

<llo_original>
// kernel: _dense_pallas.1
$region0: #{_dense_pallas.1}
  #allocation0 [shape = 'u32[]', space=smem, size = 0x4, offset = 0x4, fixed_abs, tag = 'smem constant byte address 0x4 - core index']
  #allocation1 [shape = 'u32[72,128]{1,0:T(1,128)}', space=vmem, size = 0x9000, scoped, tag = 'internal scratch']
  %s0 = inlined_call_operand.vmem [shape: f32[128,128], index: 0, kind: input, shape index: {}]
  %s1 = inlined_call_operand.vmem [shape: f32[32,128], index: 1, kind: input, shape index: {}]
  %s2 = inlined_call_operand.vmem [shape: f32[32,128], index: 2, kind: output, shape index: {}]
  %s3 = sld [smem:[#allocation0]]
  $region41: #{_dense_pallas.1} parent=0
    _
  %s5 = ssub.s32 1, %s3
  %s6 = scalar_select 0, %s5, %s3
  loop: start=0, step=1, limit=4
  $region2: #{_dense_pallas.1} parent=0 // loop_pre_header
    _
  $region3: #{_dense_pallas.1} parent=0 // loop_header
    %s8 = sphi 0, %s12
    %p9 = scmp.ge.s32.totalorder %s8, 4
    %s16 = sphi 0, %s16
    %s18 = sphi 0, %s16
    %s19 = sphi 0, %s18
    %s33 = sphi 0, %s19
    %s39 = sphi 0, %s41
    %s42 = sphi 0, %s39
    %s43 = sphi 0, %s42
    %s59 = sphi 0, %s43
    %s65 = sphi 0, %s67
    %s68 = sphi 0, %s65
    %s69 = sphi 0, %s68
    %s85 = sphi 0, %s69
  $region4: #{_dense_pallas.1} parent=0 // loop_header_branch
    %11 = sbr.rel (%p9) target = $region8
  $region5: #{_dense_pallas.1} parent=0 // loop_body
    %s13 = ssub.s32 %s8, 1
    %s14 = ssub.s32 %s8, 2
    %s15 = sadd.s32 %s8, 1
    %s17 = sadd.s32 %s16, 1
    %p20 = scmp.eq.s32.totalorder %s8, 1
    %p21 = scmp.ne.s32.totalorder %s16, %s18
    %p22 = scmp.eq.s32.totalorder %s8, 0
    %p23 = por %p21, %p22
    %p24 = scmp.ne.s32.totalorder %s16, %s18
    %p25 = scmp.eq.s32.totalorder %s13, 1
    %p26 = por %p24, %p25
    %p27 = scmp.ne.s32.totalorder %s18, %s19
    %p28 = scmp.eq.s32.totalorder %s13, 0
    %p29 = por %p27, %p28
    %p30 = scmp.ne.s32.totalorder %s18, %s19
    %p31 = scmp.eq.s32.totalorder %s14, 1
    %p32 = por %p30, %p31
    %p34 = scmp.ne.s32.totalorder %s19, %s33
    %p35 = scmp.eq.s32.totalorder %s14, 0
    %p36 = por %p34, %p35
    %s37 = ssub.s32 %s8, %s15
    %p38 = scmp.eq.s32.totalorder %s37, 0
    %s40 = sadd.s32 %s39, 1
    %s41 = scalar_select %p38, %s39, %s40
    %p44 = pneg %p38
    %p45 = scmp.eq.s32.totalorder %s8, 1
    %p46 = por %p44, %p45
    %p47 = scmp.ne.s32.totalorder %s39, %s42
    %p48 = scmp.eq.s32.totalorder %s8, 0
    %p49 = por %p47, %p48
    %p50 = scmp.ne.s32.totalorder %s39, %s42
    %p51 = scmp.eq.s32.totalorder %s13, 1
    %p52 = por %p50, %p51
    %p53 = scmp.ne.s32.totalorder %s42, %s43
    %p54 = scmp.eq.s32.totalorder %s13, 0
    %p55 = por %p53, %p54
    %p56 = scmp.ne.s32.totalorder %s42, %s43
    %p57 = scmp.eq.s32.totalorder %s14, 1
    %p58 = por %p56, %p57
    %p60 = scmp.ne.s32.totalorder %s43, %s59
    %p61 = scmp.eq.s32.totalorder %s14, 0
    %p62 = por %p60, %p61
    %s63 = ssub.s32 %s8, %s15
    %p64 = scmp.eq.s32.totalorder %s63, 0
    %s66 = sadd.s32 %s65, 1
    %s67 = scalar_select %p64, %s65, %s66
    %p70 = pneg %p64
    %p71 = scmp.eq.s32.totalorder %s8, 1
    %p72 = por %p70, %p71
    %p73 = scmp.ne.s32.totalorder %s65, %s68
    %p74 = scmp.eq.s32.totalorder %s8, 0
    %p75 = por %p73, %p74
    %p76 = scmp.ne.s32.totalorder %s65, %s68
    %p77 = scmp.eq.s32.totalorder %s13, 1
    %p78 = por %p76, %p77
    %p79 = scmp.ne.s32.totalorder %s68, %s69
    %p80 = scmp.eq.s32.totalorder %s13, 0
    %p81 = por %p79, %p80
    %p82 = scmp.ne.s32.totalorder %s68, %s69
    %p83 = scmp.eq.s32.totalorder %s14, 1
    %p84 = por %p82, %p83
    %p86 = scmp.ne.s32.totalorder %s69, %s85
    %p87 = scmp.eq.s32.totalorder %s14, 0
    %p88 = por %p86, %p87
    %p89 = scmp.le.s32.totalorder 1, %s8
    %p90 = scmp.lt.s32.totalorder %s8, 3
    %p91 = pnand %p89, %p90
    %p92 = pneg %p91
    // Predicated region
    $region9: #{_dense_pallas.1} parent=5 // pred_check
      _
    $region10: #{_dense_pallas.1} parent=5 // pred_check_branch
      %94 = sbr.rel (%p91) target = $region12
    $region11: #{_dense_pallas.1} parent=5 // pred_region
      %s95 = ssub.s32 %s8, 1
      // Predicated region
      $region13: #{_dense_pallas.1} parent=11 // pred_check
        %p96 = pneg %p29
      $region14: #{_dense_pallas.1} parent=11 // pred_check_branch
        %98 = sbr.rel (%p96) target = $region16
      $region15: #{_dense_pallas.1} parent=11 // pred_region
        _
      $region16: #{_dense_pallas.1} parent=11 // pred_fallthru
        _
    $region12: #{_dense_pallas.1} parent=5 // pred_fallthru
      _
    %p99 = scmp.lt.s32.totalorder %s8, 2
    // Predicated region
    $region17: #{_dense_pallas.1} parent=5 // pred_check
      %p100 = pneg %p99
    $region18: #{_dense_pallas.1} parent=5 // pred_check_branch
      %102 = sbr.rel (%p100) target = $region20
    $region19: #{_dense_pallas.1} parent=5 // pred_region
      // Predicated region
      $region21: #{_dense_pallas.1} parent=19 // pred_check
        %p103 = pneg %p49
      $region22: #{_dense_pallas.1} parent=19 // pred_check_branch
        %105 = sbr.rel (%p103) target = $region24
      $region23: #{_dense_pallas.1} parent=19 // pred_region
        %s106 = smul.u32 2, %s8
        %p107 = scmp.lt.s32.totalorder %s106, 3
        %s108 = scalar_select %p107, %s106, 3
        %s109 = smul.addr %s108, 8
        %s110 = scalar_lea.vmem %s1, %s109
        %s111 = smul.u32 2, %s8
      $region24: #{_dense_pallas.1} parent=19 // pred_fallthru
        _
    $region20: #{_dense_pallas.1} parent=5 // pred_fallthru
      _
    %p112 = scmp.le.s32.totalorder 1, %s8
    %p113 = scmp.lt.s32.totalorder %s8, 3
    %p114 = pnand %p112, %p113
    %p115 = pneg %p114
    // Predicated region
    $region25: #{_dense_pallas.1} parent=5 // pred_check
      _
    $region26: #{_dense_pallas.1} parent=5 // pred_check_branch
      %117 = sbr.rel (%p114) target = $region28
    $region27: #{_dense_pallas.1} parent=5 // pred_region
      %s118 = ssub.s32 %s8, 1
      %p119 = pneg %p29
      %p120 = pneg %p26
      %s121 = smul.u32 2, %s13
      %p122 = scmp.lt.s32.totalorder %s121, 3
      %s123 = scalar_select %p122, %s121, 3
      %s124 = smul.addr %s123, 8
      %s125 = scalar_lea.vmem %s1, %s124
      %p126 = pneg %p55
      %p127 = pneg %p52
      %p128 = pneg %p81
      %p129 = pneg %p78
      %s130 = smul.u32 2, %s13
      %p131 = scmp.lt.s32.totalorder %s130, 3
      %s132 = scalar_select %p131, %s130, 3
      %s133 = smul.addr %s132, 8
      %s134 = scalar_lea.vmem %s2, %s133
      %s135 = smul.u32 2, %s13
      %p136 = scmp.lt.s32.totalorder %s135, 3
      %s137 = scalar_select %p136, %s135, 3
      %s138 = smul.addr %s137, 8
      %s139 = scalar_lea.vmem %s1, %s138
      %s140 = smul.u32 2, %s13
      %s141 = smul.u32 2, %s13
      %p142 = scmp.lt.s32.totalorder %s141, 3
      %s143 = scalar_select %p142, %s141, 3
      %s144 = smul.addr %s143, 8
      %s145 = scalar_lea.vmem %s2, %s144
      %s146 = smul.u32 2, %s13
      %v147 = vld [vmem:[%s139] sm:$0xff]
      %v148 = vld [vmem:[%s139 + $0x8] sm:$0xff]
      %v149 = vld [vmem:[%s0] sm:$0xff]
      %v150 = vld [vmem:[%s0 + $0x8] sm:$0xff]
      %v151 = vld [vmem:[%s0 + $0x10] sm:$0xff]
      %v152 = vld [vmem:[%s0 + $0x18] sm:$0xff]
      %v153 = vld [vmem:[%s0 + $0x20] sm:$0xff]
      %v154 = vld [vmem:[%s0 + $0x28] sm:$0xff]
      %v155 = vld [vmem:[%s0 + $0x30] sm:$0xff]
      %v156 = vld [vmem:[%s0 + $0x38] sm:$0xff]
      %v157 = vld [vmem:[%s0 + $0x40] sm:$0xff]
      %v158 = vld [vmem:[%s0 + $0x48] sm:$0xff]
      %v159 = vld [vmem:[%s0 + $0x50] sm:$0xff]
      %v160 = vld [vmem:[%s0 + $0x58] sm:$0xff]
      %v161 = vld [vmem:[%s0 + $0x60] sm:$0xff]
      %v162 = vld [vmem:[%s0 + $0x68] sm:$0xff]
      %v163 = vld [vmem:[%s0 + $0x70] sm:$0xff]
      %v164 = vld [vmem:[%s0 + $0x78] sm:$0xff]
      %165 = vmatpush.msra.mxu0 %v164
      %166 = vmatpush.msra.mxu0 %v163
      %167 = vmatpush.msra.mxu0 %v162
      %168 = vmatpush.msra.mxu0 %v161
      %169 = vmatpush.msra.mxu0 %v160
      %170 = vmatpush.msra.mxu0 %v159
      %171 = vmatpush.msra.mxu0 %v158
      %172 = vmatpush.msra.mxu0 %v157
      %173 = vmatpush.msra.mxu0 %v156
      %174 = vmatpush.msra.mxu0 %v155
      %175 = vmatpush.msra.mxu0 %v154
      %176 = vmatpush.msra.mxu0 %v153
      %177 = vmatpush.msra.mxu0 %v152
      %178 = vmatpush.msra.mxu0 %v151
      %179 = vmatpush.msra.mxu0 %v150
      %180 = vmatpush.msra.mxu0 %v149
      %181 = vmatmul.f32.gmra.mxu0 %v147
      %v182 = vpop.f32.mrf.mxu0
      %v183 = vadd.f32 0.0, %v182
      %184 = vmatmul.f32.gmra.mxu0 %v148
      %v185 = vpop.f32.mrf.mxu0
      %v186 = vadd.f32 0.0, %v185
      %187 = vdwg.mxu0
      %188 = vst [vmem:[%s145] sm:$0xff] %v183
      %189 = vst [vmem:[%s145 + $0x8] sm:$0xff] %v186
      %s190 = smul.u32 2, %s13
      %p191 = scmp.lt.s32.totalorder %s190, 3
      %s192 = scalar_select %p191, %s190, 3
      %s193 = smul.addr %s192, 8
      %s194 = scalar_lea.vmem %s2, %s193
      // Predicated region
      $region29: #{_dense_pallas.1} parent=27 // pred_check
        %p195 = pneg %p78
      $region30: #{_dense_pallas.1} parent=27 // pred_check_branch
        %197 = sbr.rel (%p195) target = $region32
      $region31: #{_dense_pallas.1} parent=27 // pred_region
        %s198 = smul.u32 2, %s13
      $region32: #{_dense_pallas.1} parent=27 // pred_fallthru
        _
    $region28: #{_dense_pallas.1} parent=5 // pred_fallthru
      _
    %p199 = scmp.le.s32.totalorder 2, %s8
    // Predicated region
    $region33: #{_dense_pallas.1} parent=5 // pred_check
      %p200 = pneg %p199
    $region34: #{_dense_pallas.1} parent=5 // pred_check_branch
      %202 = sbr.rel (%p200) target = $region36
    $region35: #{_dense_pallas.1} parent=5 // pred_region
      %s203 = ssub.s32 %s8, 2
      // Predicated region
      $region37: #{_dense_pallas.1} parent=35 // pred_check
        %p204 = pneg %p84
      $region38: #{_dense_pallas.1} parent=35 // pred_check_branch
        %206 = sbr.rel (%p204) target = $region40
      $region39: #{_dense_pallas.1} parent=35 // pred_region
        %s207 = smul.u32 2, %s14
        %p208 = scmp.lt.s32.totalorder %s207, 3
        %s209 = scalar_select %p208, %s207, 3
        %s210 = smul.addr %s209, 8
        %s211 = scalar_lea.vmem %s2, %s210
      $region40: #{_dense_pallas.1} parent=35 // pred_fallthru
        _
    $region36: #{_dense_pallas.1} parent=5 // pred_fallthru
      _
  $region6: #{_dense_pallas.1} parent=0 // loop_footer
    %s12 = sadd.s32 1, %s8
  $region7: #{_dense_pallas.1} parent=0 // loop_footer_branch
    %7 = sbr.rel target = $region3
  $region8: #{_dense_pallas.1} parent=0 // loop_exit
    _

</llo_original>
